<compile_context>
chip_gen: v5e
topology: v5e:2x2
jax: 0.10.0
libtpu: 0.0.40
codegen_flags: <defaults>
</compile_context>

<pallas_src>
import math

import jax
import jax.numpy as jnp
from jax.experimental import pallas as pl
from jax.experimental.pallas import tpu as pltpu


def _round_up(a, b):
    return (a + b - 1) // b * b


def _pick_nb(N, V, max_lanes=1024):
    """Samples per grid step.

    Prefer nb*V a multiple of 128 (dense vst, no trailing partial N-tiles) and
    <= max_lanes lanes (bounds the (nb*V)^2 block-diagonal A and the nb-fold MXU
    flop blow-up of the fused graph contraction). Cap nb at ceil(N/2) so the batch
    grid still splits across v7x's two TensorCores and batch padding stays < 2x.
    """
    cap = max(1, (N + 1) // 2)
    unit = 128 // math.gcd(V, 128)            # smallest nb with (nb * V) % 128 == 0
    if unit <= cap and unit * V <= max_lanes:
        nb = unit
        while nb * 2 <= cap and nb * 2 * V <= max_lanes:
            nb *= 2
    else:
        nb = max(1, min(cap, max_lanes // max(V, 1)))
    return nb


def _make_kernel(nb, reorder, compute_dtype):
    def kernel(x_ref, a_ref, m_ref, w_ref, o_ref):
        # x_ref: (1, C_in+1, nb*V)  lane-dense x slab, last row = ones (bias row)
        # a_ref: (1, V, nb*V)       lane-dense adjacency: a[v, i*V + w] = A[i, v, w]
        # m_ref: (nb*V, nb*V)       0/1 block-diagonal mask (resident, constant map)
        # w_ref: (C_out, C_in+1)    [W | b]
        # o_ref: (1, C_out, nb*V)
        a = a_ref[0]
        if nb == 1:
            a_bd = a                                               # already block diag
        else:
            # Block-diagonal expansion of the nb per-sample VxV adjacencies: one
            # (C, nb*V) @ (nb*V, nb*V) MXU matmul replaces nb tiny VxV matmuls.
            a_bd = jnp.tile(a, (nb, 1)) * m_ref[...]
        w = w_ref[...]
        xe = x_ref[0]
        if reorder:
            # [W|b] @ ([x;1] @ A_bd): graph contraction runs over C_in+1 rows.
            xa = jnp.dot(xe, a_bd, preferred_element_type=jnp.float32)
            out = jnp.dot(w, xa.astype(compute_dtype),
                          preferred_element_type=jnp.float32)
        else:
            # ([W|b] @ [x;1]) @ A_bd: graph contraction runs over C_out rows.
            conv = jnp.dot(w, xe, preferred_element_type=jnp.float32)
            out = jnp.dot(conv.astype(compute_dtype), a_bd,
                          preferred_element_type=jnp.float32)
        o_ref[0] = out.astype(o_ref.dtype)

    return kernel


def conv_temporal_graphical(x, A, weight, bias, *, compute_dtype=jnp.bfloat16):
    """x: (N, C_in, 1, V), A: (N, V, V), weight: (C_out, C_in, 1, 1), bias: (C_out,)."""
    N, C_in, T, V = x.shape
    if T != 1:
        # TODO(synk): general t_kernel_size > 1 / T > 1 temporal conv path not
        # implemented (module default is 1; the reference einsum also requires T==1).
        raise NotImplementedError("only T == 1 (t_kernel_size == 1) supported")
    C_out = weight.shape[0]
    out_dtype = x.dtype

    nb = _pick_nb(N, V)
    n_pad = _round_up(N, nb)
    g = n_pad // nb
    nbv = nb * V
    C_e = C_in + 1

    # ---- one fused wrapper pass per input: cast -> pad -> lane-dense re-layout ----
    # x: (N,C_in,1,V) -> (g, C_in+1, nb*V) bf16; column i*V+v = (sample i, node v);
    # the appended ones row folds bias and colsum(A) into the MXU matmuls.
    x3 = x.reshape(N, C_in, V).astype(compute_dtype)
    if n_pad != N:
        x3 = jnp.pad(x3, ((0, n_pad - N), (0, 0), (0, 0)))
    x_dense = x3.reshape(g, nb, C_in, V).transpose(0, 2, 1, 3).reshape(g, C_in, nbv)
    x_dense = jnp.concatenate(
        [x_dense, jnp.ones((g, 1, nbv), dtype=compute_dtype)], axis=1)   # (g, C_e, nbv)

    # A: (N,V,V) -> (g, V, nb*V) bf16 with a_dense[gg, v, i*V+w] = A[gg*nb+i, v, w].
    a3 = A.astype(compute_dtype)
    if n_pad != N:
        a3 = jnp.pad(a3, ((0, n_pad - N), (0, 0), (0, 0)))
    a_dense = a3.reshape(g, nb, V, V).transpose(0, 2, 1, 3).reshape(g, V, nbv)

    # 0/1 block-diagonal mask, resident in VMEM for the whole grid (constant map).
    blk = jnp.arange(nbv, dtype=jnp.int32) // V
    mask = (blk[:, None] == blk[None, :]).astype(compute_dtype)          # (nbv, nbv)

    # [W | b]: bias folded as an extra input channel matching the ones row of x.
    w2 = weight.reshape(C_out, C_in).astype(compute_dtype)
    we = jnp.concatenate([w2, bias.reshape(C_out, 1).astype(compute_dtype)], axis=1)

    reorder = C_e <= C_out
    kernel = _make_kernel(nb, reorder, compute_dtype)

    out = pl.pallas_call(
        kernel,
        out_shape=jax.ShapeDtypeStruct((g, C_out, nbv), out_dtype),
        grid_spec=pltpu.PrefetchScalarGridSpec(
            num_scalar_prefetch=0,
            grid=(g,),
            in_specs=[
                pl.BlockSpec((1, C_e, nbv), lambda n: (n, 0, 0)),
                pl.BlockSpec((1, V, nbv), lambda n: (n, 0, 0)),
                pl.BlockSpec((nbv, nbv), lambda n: (0, 0)),     # constant: no re-DMA
                pl.BlockSpec((C_out, C_e), lambda n: (0, 0)),   # constant: no re-DMA
            ],
            out_specs=pl.BlockSpec((1, C_out, nbv), lambda n: (n, 0, 0)),
        ),
        compiler_params=pltpu.CompilerParams(
            dimension_semantics=("parallel",),
        ),
    )(x_dense, a_dense, mask, we)

    # (g, C_out, nb*V) -> (N, C_out, V).
    # TODO(synk): if the consumer accepts the lane-dense (g, C_out, nb*V) layout this
    # fix-up pass (one extra HBM read+write of the output) can be dropped.
    if nb == 1:
        y = out.reshape(n_pad, C_out, V)[:N]
    else:
        y = out.reshape(g, C_out, nb, V).transpose(0, 2, 1, 3).reshape(n_pad, C_out, V)[:N]
    return y, A


def _reference(x, A, weight, bias, compute_dtype=jnp.bfloat16):
    # f32 reference on the same bf16-quantized inputs the kernel consumes.
    N, C_in, _, V = x.shape
    C_out = weight.shape[0]
    xq = x.reshape(N, C_in, V).astype(compute_dtype).astype(jnp.float32)
    aq = A.astype(compute_dtype).astype(jnp.float32)
    wq = weight.reshape(C_out, C_in).astype(compute_dtype).astype(jnp.float32)
    bq = bias.astype(compute_dtype).astype(jnp.float32)
    conv = jnp.einsum("oi,niv->nov", wq, xq) + bq.reshape(1, C_out, 1)
    return jnp.einsum("ncv,nvw->ncw", conv, aq)


if __name__ == "__main__":
    # Small shapes consistent with the module: N=2, C_in=4, T=1, V=16, C_out=8.
    N, C_in, C_out, T, V = 2, 4, 8, 1, 16

    key = jax.random.PRNGKey(0)
    kx, ka, kw, kb, kx2, kw2, kb2 = jax.random.split(key, 7)

    x = jax.random.normal(kx, (N, C_in, T, V), dtype=jnp.float32)
    A = jax.random.normal(ka, (N, V, V), dtype=jnp.float32)
    weight = jax.random.normal(kw, (C_out, C_in, 1, 1), dtype=jnp.float32) * 0.1
    bias = jax.random.normal(kb, (C_out,), dtype=jnp.float32) * 0.1

    out, A_out = conv_temporal_graphical(x, A, weight, bias)
    out = jax.block_until_ready(out)

    ref = _reference(x, A, weight, bias)
    assert out.shape == (N, C_out, V)
    assert A_out.shape == (N, V, V)
    assert jnp.allclose(out, ref, atol=5e-2, rtol=5e-2), "mismatch vs reference (reorder path)"

    # Also exercise the non-reordered (direct) association order: C_in + 1 > C_out.
    C_in2, C_out2 = C_out, C_in
    x2 = jax.random.normal(kx2, (N, C_in2, T, V), dtype=jnp.float32)
    weight2 = jax.random.normal(kw2, (C_out2, C_in2, 1, 1), dtype=jnp.float32) * 0.1
    bias2 = jax.random.normal(kb2, (C_out2,), dtype=jnp.float32) * 0.1

    out2, _ = conv_temporal_graphical(x2, A, weight2, bias2)
    out2 = jax.block_until_ready(out2)
    ref2 = _reference(x2, A, weight2, bias2)
    assert out2.shape == (N, C_out2, V)
    assert jnp.allclose(out2, ref2, atol=5e-2, rtol=5e-2), "mismatch vs reference (direct path)"

    print("KERNEL_OK")
</pallas_src>

<mosaic_0001>
module attributes {stable_mosaic.version = 11 : i64} {
  func.func @kernel(%arg0: i32, %arg1: memref<1x5x16xbf16, #tpu.memory_space<vmem>>, %arg2: memref<1x16x16xbf16, #tpu.memory_space<vmem>>, %arg3: memref<16x16xbf16, #tpu.memory_space<vmem>>, %arg4: memref<8x5xbf16, #tpu.memory_space<vmem>>, %arg5: memref<1x8x16xf32, #tpu.memory_space<vmem>>) attributes {dimension_semantics = [#tpu.dimension_semantics<parallel>], iteration_bounds = array<i64: 2>, scalar_prefetch = 0 : i64, scratch_operands = 0 : i64, tpu.core_type = #tpu.core_type<tc>, window_params = [{transform_indices = @transform_0, window_bounds = array<i64: 1, 5, 16>}, {transform_indices = @transform_1, window_bounds = array<i64: 1, 16, 16>}, {pipeline_mode = #tpu.pipeline_mode<synchronous>, transform_indices = @transform_2, window_bounds = array<i64: 16, 16>}, {pipeline_mode = #tpu.pipeline_mode<synchronous>, transform_indices = @transform_3, window_bounds = array<i64: 8, 5>}, {transform_indices = @transform_4, window_bounds = array<i64: 1, 8, 16>}]} {
    %c0 = arith.constant 0 : index
    %c0_0 = arith.constant 0 : index
    %c0_1 = arith.constant 0 : index
    %0 = vector.load %arg2[%c0, %c0_0, %c0_1] : memref<1x16x16xbf16, #tpu.memory_space<vmem>>, vector<1x16x16xbf16>
    %1 = vector.shape_cast %0 : vector<1x16x16xbf16> to vector<16x16xbf16>
    %c0_2 = arith.constant 0 : index
    %c0_3 = arith.constant 0 : index
    %2 = vector.load %arg4[%c0_2, %c0_3] : memref<8x5xbf16, #tpu.memory_space<vmem>>, vector<8x5xbf16>
    %c0_4 = arith.constant 0 : index
    %c0_5 = arith.constant 0 : index
    %c0_6 = arith.constant 0 : index
    %3 = vector.load %arg1[%c0_4, %c0_5, %c0_6] : memref<1x5x16xbf16, #tpu.memory_space<vmem>>, vector<1x5x16xbf16>
    %4 = vector.shape_cast %3 : vector<1x5x16xbf16> to vector<5x16xbf16>
    %cst = arith.constant dense<0.000000e+00> : vector<5x16xf32>
    %5 = tpu.matmul %4, %1, %cst {dimension_numbers = #tpu.dot_dimension_numbers<[1], [0], [0], [1], [0, 0, 1, 1], [], []>} : vector<5x16xbf16>, vector<16x16xbf16>, vector<5x16xf32> -> vector<5x16xf32>
    %6 = arith.truncf %5 : vector<5x16xf32> to vector<5x16xbf16>
    %cst_7 = arith.constant dense<0.000000e+00> : vector<8x16xf32>
    %7 = tpu.matmul %2, %6, %cst_7 {dimension_numbers = #tpu.dot_dimension_numbers<[1], [0], [0], [1], [0, 0, 1, 1], [], []>} : vector<8x5xbf16>, vector<5x16xbf16>, vector<8x16xf32> -> vector<8x16xf32>
    %c0_8 = arith.constant 0 : index
    %c0_9 = arith.constant 0 : index
    %c0_10 = arith.constant 0 : index
    %8 = vector.load %arg5[%c0_8, %c0_9, %c0_10] : memref<1x8x16xf32, #tpu.memory_space<vmem>>, vector<1x8x16xf32>
    %9 = vector.shape_cast %8 : vector<1x8x16xf32> to vector<8x16xf32>
    %10 = vector.shape_cast %7 : vector<8x16xf32> to vector<1x8x16xf32>
    tpu.vector_store %arg5[%c0_8, %c0_9, %c0_10], %10 {strides = array<i32>} : memref<1x8x16xf32, #tpu.memory_space<vmem>>, vector<1x8x16xf32>,
    return
  }
  func.func @transform_0(%arg0: i32) -> (i32, i32, i32) {
    %c0_i32 = arith.constant 0 : i32
    %c0_i32_0 = arith.constant 0 : i32
    %c0_i32_1 = arith.constant 0 : i32
    return %arg0, %c0_i32, %c0_i32_0 : i32, i32, i32
  }
  func.func @transform_1(%arg0: i32) -> (i32, i32, i32) {
    %c0_i32 = arith.constant 0 : i32
    %c0_i32_0 = arith.constant 0 : i32
    %c0_i32_1 = arith.constant 0 : i32
    return %arg0, %c0_i32, %c0_i32_0 : i32, i32, i32
  }
  func.func @transform_2(%arg0: i32) -> (i32, i32) {
    %c0_i32 = arith.constant 0 : i32
    %c0_i32_0 = arith.constant 0 : i32
    %c0_i32_1 = arith.constant 0 : i32
    return %c0_i32, %c0_i32_0 : i32, i32
  }
  func.func @transform_3(%arg0: i32) -> (i32, i32) {
    %c0_i32 = arith.constant 0 : i32
    %c0_i32_0 = arith.constant 0 : i32
    %c0_i32_1 = arith.constant 0 : i32
    return %c0_i32, %c0_i32_0 : i32, i32
  }
  func.func @transform_4(%arg0: i32) -> (i32, i32, i32) {
    %c0_i32 = arith.constant 0 : i32
    %c0_i32_0 = arith.constant 0 : i32
    %c0_i32_1 = arith.constant 0 : i32
    return %arg0, %c0_i32, %c0_i32_0 : i32, i32, i32
  }
}

</mosaic_0001>

<llo_original>
// kernel: tpu_custom_call.1
$region0: #{tpu_custom_call.1}
  #allocation0 [shape = 'u32[]', space=smem, size = 0x4, offset = 0x4, fixed_abs, tag = 'smem constant byte address 0x4 - core index']
  #allocation1 [shape = 'u32[72,128]{1,0:T(1,128)}', space=vmem, size = 0x9000, scoped, tag = 'internal scratch']
  %s0 = inlined_call_operand.vmem [shape: bf16[2,5,16], index: 0, kind: input, shape index: {}]
  %s1 = inlined_call_operand.hbm [shape: bf16[2,16,16], index: 1, kind: input, shape index: {}]
  %s2 = inlined_call_operand.vmem [shape: bf16[16,16], index: 2, kind: input, shape index: {}]
  %s3 = inlined_call_operand.vmem [shape: bf16[8,5], index: 3, kind: input, shape index: {}]
  %s4 = inlined_call_operand.hbm [shape: f32[2,8,16], index: 4, kind: output, shape index: {}]
  %s5 = sld [smem:[#allocation0]]
  $region53: #{tpu_custom_call.1} parent=0
    _
  %s7 = ssub.s32 1, %s5
  %s8 = scalar_select 0, %s7, %s5
  $region1: #{tpu_custom_call.1} parent=0
    #allocation2 [shape = 'u8[8192]{0}', space=vmem, size = 0x2000, scoped, tag = 'input window, operand 1']
    #allocation3 [shape = 's32[2]{0}', space=sflag, size = 0x8, scoped, tag = 'scoped memory for tpu_custom_call.1']
    #allocation4 [shape = 's32[2]{0}', space=sflag, size = 0x8, scoped, tag = 'scoped memory for tpu_custom_call.1']
    #allocation5 [shape = 'u8[8192]{0}', space=vmem, size = 0x2000, scoped, tag = 'output window, operand 0']
    %9 = vsyncpa [#allocation3], 0
    %s10 = scalar_lea.sflag [#allocation3], 1
    %11 = vsyncpa %s10, 0
    %12 = vsyncpa [#allocation4], 0
    %s13 = scalar_lea.sflag [#allocation4], 1
    %14 = vsyncpa %s13, 0
    loop: start=0, step=1, limit=4
    $region2: #{tpu_custom_call.1} parent=1 // loop_pre_header
      _
    $region3: #{tpu_custom_call.1} parent=1 // loop_header
      %s16 = sphi 0, %s20
      %p17 = scmp.ge.s32.totalorder %s16, 4
      %s26 = sphi 0, %s28
      %s29 = sphi 0, %s26
      %s30 = sphi 0, %s29
      %s46 = sphi 0, %s30
      %s52 = sphi 0, %s54
      %s55 = sphi 0, %s52
      %s56 = sphi 0, %s55
      %s72 = sphi 0, %s56
      %s76 = sphi 0, %s76
      %s78 = sphi 0, %s76
      %s79 = sphi 0, %s78
      %s93 = sphi 0, %s79
      %s97 = sphi 0, %s97
      %s99 = sphi 0, %s97
      %s100 = sphi 0, %s99
      %s114 = sphi 0, %s100
      %s120 = sphi 0, %s122
      %s123 = sphi 0, %s120
      %s124 = sphi 0, %s123
      %s140 = sphi 0, %s124
    $region4: #{tpu_custom_call.1} parent=1 // loop_header_branch
      %19 = sbr.rel (%p17) target = $region8
    $region5: #{tpu_custom_call.1} parent=1 // loop_body
      %s21 = ssub.s32 %s16, 1
      %s22 = ssub.s32 %s16, 2
      %s23 = sadd.s32 %s16, 1
      %s24 = ssub.s32 %s16, %s23
      %p25 = scmp.eq.s32.totalorder %s24, 0
      %s27 = sadd.s32 %s26, 1
      %s28 = scalar_select %p25, %s26, %s27
      %p31 = pneg %p25
      %p32 = scmp.eq.s32.totalorder %s16, 1
      %p33 = por %p31, %p32
      %p34 = scmp.ne.s32.totalorder %s26, %s29
      %p35 = scmp.eq.s32.totalorder %s16, 0
      %p36 = por %p34, %p35
      %p37 = scmp.ne.s32.totalorder %s26, %s29
      %p38 = scmp.eq.s32.totalorder %s21, 1
      %p39 = por %p37, %p38
      %p40 = scmp.ne.s32.totalorder %s29, %s30
      %p41 = scmp.eq.s32.totalorder %s21, 0
      %p42 = por %p40, %p41
      %p43 = scmp.ne.s32.totalorder %s29, %s30
      %p44 = scmp.eq.s32.totalorder %s22, 1
      %p45 = por %p43, %p44
      %p47 = scmp.ne.s32.totalorder %s30, %s46
      %p48 = scmp.eq.s32.totalorder %s22, 0
      %p49 = por %p47, %p48
      %s50 = ssub.s32 %s16, %s23
      %p51 = scmp.eq.s32.totalorder %s50, 0
      %s53 = sadd.s32 %s52, 1
      %s54 = scalar_select %p51, %s52, %s53
      %p57 = pneg %p51
      %p58 = scmp.eq.s32.totalorder %s16, 1
      %p59 = por %p57, %p58
      %p60 = scmp.ne.s32.totalorder %s52, %s55
      %p61 = scmp.eq.s32.totalorder %s16, 0
      %p62 = por %p60, %p61
      %p63 = scmp.ne.s32.totalorder %s52, %s55
      %p64 = scmp.eq.s32.totalorder %s21, 1
      %p65 = por %p63, %p64
      %p66 = scmp.ne.s32.totalorder %s55, %s56
      %p67 = scmp.eq.s32.totalorder %s21, 0
      %p68 = por %p66, %p67
      %p69 = scmp.ne.s32.totalorder %s55, %s56
      %p70 = scmp.eq.s32.totalorder %s22, 1
      %p71 = por %p69, %p70
      %p73 = scmp.ne.s32.totalorder %s56, %s72
      %p74 = scmp.eq.s32.totalorder %s22, 0
      %p75 = por %p73, %p74
      %s77 = sadd.s32 %s76, 1
      %p80 = scmp.eq.s32.totalorder %s16, 1
      %p81 = scmp.ne.s32.totalorder %s76, %s78
      %p82 = scmp.eq.s32.totalorder %s16, 0
      %p83 = por %p81, %p82
      %p84 = scmp.ne.s32.totalorder %s76, %s78
      %p85 = scmp.eq.s32.totalorder %s21, 1
      %p86 = por %p84, %p85
      %p87 = scmp.ne.s32.totalorder %s78, %s79
      %p88 = scmp.eq.s32.totalorder %s21, 0
      %p89 = por %p87, %p88
      %p90 = scmp.ne.s32.totalorder %s78, %s79
      %p91 = scmp.eq.s32.totalorder %s22, 1
      %p92 = por %p90, %p91
      %p94 = scmp.ne.s32.totalorder %s79, %s93
      %p95 = scmp.eq.s32.totalorder %s22, 0
      %p96 = por %p94, %p95
      %s98 = sadd.s32 %s97, 1
      %p101 = scmp.eq.s32.totalorder %s16, 1
      %p102 = scmp.ne.s32.totalorder %s97, %s99
      %p103 = scmp.eq.s32.totalorder %s16, 0
      %p104 = por %p102, %p103
      %p105 = scmp.ne.s32.totalorder %s97, %s99
      %p106 = scmp.eq.s32.totalorder %s21, 1
      %p107 = por %p105, %p106
      %p108 = scmp.ne.s32.totalorder %s99, %s100
      %p109 = scmp.eq.s32.totalorder %s21, 0
      %p110 = por %p108, %p109
      %p111 = scmp.ne.s32.totalorder %s99, %s100
      %p112 = scmp.eq.s32.totalorder %s22, 1
      %p113 = por %p111, %p112
      %p115 = scmp.ne.s32.totalorder %s100, %s114
      %p116 = scmp.eq.s32.totalorder %s22, 0
      %p117 = por %p115, %p116
      %s118 = ssub.s32 %s16, %s23
      %p119 = scmp.eq.s32.totalorder %s118, 0
      %s121 = sadd.s32 %s120, 1
      %s122 = scalar_select %p119, %s120, %s121
      %p125 = pneg %p119
      %p126 = scmp.eq.s32.totalorder %s16, 1
      %p127 = por %p125, %p126
      %p128 = scmp.ne.s32.totalorder %s120, %s123
      %p129 = scmp.eq.s32.totalorder %s16, 0
      %p130 = por %p128, %p129
      %p131 = scmp.ne.s32.totalorder %s120, %s123
      %p132 = scmp.eq.s32.totalorder %s21, 1
      %p133 = por %p131, %p132
      %p134 = scmp.ne.s32.totalorder %s123, %s124
      %p135 = scmp.eq.s32.totalorder %s21, 0
      %p136 = por %p134, %p135
      %p137 = scmp.ne.s32.totalorder %s123, %s124
      %p138 = scmp.eq.s32.totalorder %s22, 1
      %p139 = por %p137, %p138
      %p141 = scmp.ne.s32.totalorder %s124, %s140
      %p142 = scmp.eq.s32.totalorder %s22, 0
      %p143 = por %p141, %p142
      %p144 = scmp.le.s32.totalorder 1, %s16
      %p145 = scmp.lt.s32.totalorder %s16, 3
      %p146 = pnand %p144, %p145
      %p147 = pneg %p146
      // Predicated region
      $region9: #{tpu_custom_call.1} parent=5 // pred_check
        _
      $region10: #{tpu_custom_call.1} parent=5 // pred_check_branch
        %149 = sbr.rel (%p146) target = $region12
      $region11: #{tpu_custom_call.1} parent=5 // pred_region
        %s150 = ssub.s32 %s16, 1
        // Predicated region
        $region13: #{tpu_custom_call.1} parent=11 // pred_check
          %p151 = pneg %p89
        $region14: #{tpu_custom_call.1} parent=11 // pred_check_branch
          %153 = sbr.rel (%p151) target = $region16
        $region15: #{tpu_custom_call.1} parent=11 // pred_region
          _
        $region16: #{tpu_custom_call.1} parent=11 // pred_fallthru
          _
        // Predicated region
        $region17: #{tpu_custom_call.1} parent=11 // pred_check
          %p154 = pneg %p110
        $region18: #{tpu_custom_call.1} parent=11 // pred_check_branch
          %156 = sbr.rel (%p154) target = $region20
        $region19: #{tpu_custom_call.1} parent=11 // pred_region
          _
        $region20: #{tpu_custom_call.1} parent=11 // pred_fallthru
          _
      $region12: #{tpu_custom_call.1} parent=5 // pred_fallthru
        _
      %p157 = scmp.lt.s32.totalorder %s16, 2
      // Predicated region
      $region21: #{tpu_custom_call.1} parent=5 // pred_check
        %p158 = pneg %p157
      $region22: #{tpu_custom_call.1} parent=5 // pred_check_branch
        %160 = sbr.rel (%p158) target = $region24
      $region23: #{tpu_custom_call.1} parent=5 // pred_region
        // Predicated region
        $region25: #{tpu_custom_call.1} parent=23 // pred_check
          %p161 = pneg %p36
        $region26: #{tpu_custom_call.1} parent=23 // pred_check_branch
          %163 = sbr.rel (%p161) target = $region28
        $region27: #{tpu_custom_call.1} parent=23 // pred_region
          %p164 = scmp.lt.s32.totalorder %s16, 1
          %s165 = scalar_select %p164, %s16, 1
          %s166 = smul.addr %s165, 4
          %s167 = scalar_lea.vmem %s0, %s166
        $region28: #{tpu_custom_call.1} parent=23 // pred_fallthru
          _
        // Predicated region
        $region29: #{tpu_custom_call.1} parent=23 // pred_check
          %p168 = pneg %p62
        $region30: #{tpu_custom_call.1} parent=23 // pred_check_branch
          %170 = sbr.rel (%p168) target = $region32
        $region31: #{tpu_custom_call.1} parent=23 // pred_region
          %s171 = sand.u32 %s52, 1
          %s172 = scalar_lea.sflag [#allocation3], %s171
          %s173 = sand.u32 %s52, 1
          %s174 = smul.addr %s173, 8
          %s175 = scalar_lea.vmem [#allocation2], %s174
          %177 = vsyncadd %s172, 0
          %s178 = smul.addr %s16, 2
          %s179 = smul.addr %s178, 4
          %s180 = scalar_lea.hbm %s1, %s179
          %s181 = sshll.u32 %s180, 4
          %s182 = int_to_ptr.hbm [resolvable:$true] %s181
          %s183 = sshll.u32 %s175, 4
          %s184 = int_to_ptr.vmem [resolvable:$true] %s183
          %189 = dma.hbm_to_vmem [thread:$0]  %s182, 128, %s184, %s172, 64, 64, 4
        $region32: #{tpu_custom_call.1} parent=23 // pred_fallthru
          _
      $region24: #{tpu_custom_call.1} parent=5 // pred_fallthru
        _
      %p190 = scmp.le.s32.totalorder 1, %s16
      %p191 = scmp.lt.s32.totalorder %s16, 3
      %p192 = pnand %p190, %p191
      %p193 = pneg %p192
      // Predicated region
      $region33: #{tpu_custom_call.1} parent=5 // pred_check
        _
      $region34: #{tpu_custom_call.1} parent=5 // pred_check_branch
        %195 = sbr.rel (%p192) target = $region36
      $region35: #{tpu_custom_call.1} parent=5 // pred_region
        %s196 = ssub.s32 %s16, 1
        %s197 = sand.u32 %s55, 1
        %s198 = scalar_lea.sflag [#allocation3], %s197
        %s199 = sand.u32 %s55, 1
        %s200 = smul.addr %s199, 8
        %s201 = scalar_lea.vmem [#allocation2], %s200
        // Predicated region
        $region37: #{tpu_custom_call.1} parent=35 // pred_check
          %p202 = pneg %p68
        $region38: #{tpu_custom_call.1} parent=35 // pred_check_branch
          %204 = sbr.rel (%p202) target = $region40
        $region39: #{tpu_custom_call.1} parent=35 // pred_region
          %206 = dma.done %s198, 128
        $region40: #{tpu_custom_call.1} parent=35 // pred_fallthru
          _
        %p207 = scmp.lt.s32.totalorder %s21, 1
        %s208 = scalar_select %p207, %s21, 1
        %s209 = smul.addr %s208, 4
        %s210 = scalar_lea.vmem %s0, %s209
        %p211 = pneg %p42
        %p212 = pneg %p39
        %s213 = sand.u32 %s55, 1
        %s214 = scalar_lea.sflag [#allocation3], %s213
        %s215 = sand.u32 %s55, 1
        %s216 = smul.addr %s215, 8
        %s217 = scalar_lea.vmem [#allocation2], %s216
        %p218 = pneg %p68
        %p219 = pneg %p65
        %p220 = pneg %p89
        %p221 = pneg %p86
        %p222 = pneg %p110
        %p223 = pneg %p107
        %p224 = pneg %p136
        %p225 = pneg %p133
        %s226 = sand.u32 %s123, 1
        %s227 = scalar_lea.sflag [#allocation4], %s226
        %s228 = sand.u32 %s123, 1
        %s229 = smul.addr %s228, 8
        %s230 = scalar_lea.vmem [#allocation5], %s229
        %p231 = scmp.lt.s32.totalorder %s21, 1
        %s232 = scalar_select %p231, %s21, 1
        %s233 = smul.addr %s232, 4
        %s234 = scalar_lea.vmem %s0, %s233
        %v236 = vld [vmem:[%s201] sm:$0xf]
        %v237 = vld [vmem:[%s201 + $0x4] sm:$0xf]
        %v238 = vld [vmem:[%s3] sm:$0xf]
        %v239 = vld [vmem:[%s234] sm:$0x7]
        %v242 = vunpack.c.l.b16 %v236
        %v243 = vunpack.c.l.b16 %v237
        %v244 = vpack.c.b16 %v243, %v242
        %vm246 = vcmask 130048
        %v248 = vsel %vm246, %v239, 0
        %250 = vmatpush.bf16.msra.mxu0 0
        %251 = vmatpush.bf16.msra.mxu0 0
        %252 = vmatpush.bf16.msra.mxu0 0
        %253 = vmatpush.bf16.msra.mxu0 0
        %254 = vmatpush.bf16.msra.mxu0 0
        %255 = vmatpush.bf16.msra.mxu0 0
        %256 = vmatpush.bf16.msra.mxu0 0
        %257 = vmatpush.bf16.msra.mxu0 %v244
        %258 = vmatmul.bf16.gmra.mxu0 %v248
        %v259 = vpop.f32.mrf.mxu0
        %v260 = vadd.f32 0.0, %v259
        %v261 = vpop.f32.mrf.mxu0
        %262 = vdwg.mxu0
        %v263 = vpack.c.bf16 %v260, %v260
        %vm264 = vcmask 39936
        %v266 = vsel %vm264, %v238, 0
        %vm268 = vcmask 1041408
        %vm269 = vcmask 1042432
        %v270 = vsel %vm268, 4294967295, 65535
        %v271 = vsel %vm269, %v270, 0
        %v273 = vand.u32 %v263, %v271
        %275 = vmatpush.bf16.msra.mxu0 0
        %276 = vmatpush.bf16.msra.mxu0 0
        %277 = vmatpush.bf16.msra.mxu0 0
        %278 = vmatpush.bf16.msra.mxu0 0
        %279 = vmatpush.bf16.msra.mxu0 0
        %280 = vmatpush.bf16.msra.mxu0 0
        %281 = vmatpush.bf16.msra.mxu0 0
        %282 = vmatpush.bf16.msra.mxu0 %v273
        %283 = vmatmul.bf16.gmra.mxu0 %v266
        %v284 = vpop.f32.mrf.mxu0
        %v285 = vadd.f32 0.0, %v284
        %v286 = vpop.f32.mrf.mxu0
        %287 = vdwg.mxu0
        %288 = vst.msk [vmem:[%s230] sm:$0xff] %vm246, %v285
        %s289 = sand.u32 %s123, 1
        %s290 = scalar_lea.sflag [#allocation4], %s289
        %s291 = sand.u32 %s123, 1
        %s292 = smul.addr %s291, 8
        %s293 = scalar_lea.vmem [#allocation5], %s292
        // Predicated region
        $region41: #{tpu_custom_call.1} parent=35 // pred_check
          %p294 = pneg %p133
        $region42: #{tpu_custom_call.1} parent=35 // pred_check_branch
          %296 = sbr.rel (%p294) target = $region44
        $region43: #{tpu_custom_call.1} parent=35 // pred_region
          %298 = vsyncadd %s290, 0
          %s299 = smul.addr %s21, 8
          %s300 = scalar_lea.hbm %s4, %s299
          %s302 = sshll.u32 %s293, 4
          %s303 = int_to_ptr.vmem [resolvable:$true] %s302
          %s304 = sshll.u32 %s300, 4
          %s305 = int_to_ptr.hbm [resolvable:$true] %s304
          %307 = dma.vmem_to_hbm [thread:$0]  %s303, 128, %s305, %s290
        $region44: #{tpu_custom_call.1} parent=35 // pred_fallthru
          _
      $region36: #{tpu_custom_call.1} parent=5 // pred_fallthru
        _
      %p308 = scmp.le.s32.totalorder 2, %s16
      // Predicated region
      $region45: #{tpu_custom_call.1} parent=5 // pred_check
        %p309 = pneg %p308
      $region46: #{tpu_custom_call.1} parent=5 // pred_check_branch
        %311 = sbr.rel (%p309) target = $region48
      $region47: #{tpu_custom_call.1} parent=5 // pred_region
        %s312 = ssub.s32 %s16, 2
        // Predicated region
        $region49: #{tpu_custom_call.1} parent=47 // pred_check
          %p313 = pneg %p139
        $region50: #{tpu_custom_call.1} parent=47 // pred_check_branch
          %315 = sbr.rel (%p313) target = $region52
        $region51: #{tpu_custom_call.1} parent=47 // pred_region
          %s316 = sand.u32 %s124, 1
          %s317 = scalar_lea.sflag [#allocation4], %s316
          %s318 = sand.u32 %s124, 1
          %s319 = smul.addr %s318, 8
          %s320 = scalar_lea.vmem [#allocation5], %s319
          %322 = dma.done %s317, 128
        $region52: #{tpu_custom_call.1} parent=47 // pred_fallthru
          _
      $region48: #{tpu_custom_call.1} parent=5 // pred_fallthru
        _
    $region6: #{tpu_custom_call.1} parent=1 // loop_footer
      %s20 = sadd.s32 1, %s16
    $region7: #{tpu_custom_call.1} parent=1 // loop_footer_branch
      %15 = sbr.rel target = $region3
    $region8: #{tpu_custom_call.1} parent=1 // loop_exit
      _
    %323 = vsyncpa [#allocation3], 1
    %s324 = scalar_lea.sflag [#allocation3], 1
    %325 = vsyncpa %s324, 1
    %326 = vsyncpa [#allocation4], 1
    %s327 = scalar_lea.sflag [#allocation4], 1
    %328 = vsyncpa %s327, 1

</llo_original>
